<compile_context>
chip_gen: v7x
topology: tpu7x:2x2x1
jax: 0.10.0
libtpu: 0.0.40
codegen_flags: <defaults>
</compile_context>

<pallas_src>
import jax
import jax.numpy as jnp
from jax.experimental import pallas as pl
from jax.experimental.pallas import tpu as pltpu

IN_FEATURES = 1 * 28 * 28      # 784
HIDDEN = 28
NUM_CLASSES = 10


def mnist_kernel(x_ref, w1_ref, b1_ref, w2_ref, b2_ref, o_ref):
    # x_ref : (TILE_B, 784) f32 (streamed)     w1_ref: (784, 28) bf16 (resident)
    # b1_ref: (1, 28)   f32 (resident)         w2_ref: (28, 10)  bf16 (resident)
    # b2_ref: (1, 10)   f32 (resident)         o_ref : (TILE_B, 10) f32

    # fc1 + relu: cast x to bf16 in-kernel (VPU cast is free in this mem-bound regime),
    # bf16 MXU matmul with f32 accumulation.
    x = x_ref[...].astype(w1_ref.dtype)
    h = jnp.dot(x, w1_ref[...], preferred_element_type=jnp.float32)
    h = jnp.maximum(h + b1_ref[...], 0.0)

    # fc2 (bf16 MXU, f32 accumulation) straight into the narrow 10-wide logits.
    logits = jnp.dot(h.astype(w2_ref.dtype), w2_ref[...],
                     preferred_element_type=jnp.float32) + b2_ref[...]

    # Numerically-stable log_softmax over the class axis (== F.log_softmax(dim=1)).
    m = jnp.max(logits, axis=-1, keepdims=True)
    shifted = logits - m
    lse = jnp.log(jnp.sum(jnp.exp(shifted), axis=-1, keepdims=True))
    o_ref[...] = shifted - lse


def mnist_forward(x_nchw, w1, b1, w2, b2, *, tile_b=4096, compute_dtype=jnp.bfloat16):
    """x_nchw: (B, 1, 28, 28) f32 -> (B, 10) f32 log-probabilities.

    w1: (784, 28), b1: (1, 28), w2: (28, 10), b2: (1, 10)  (weights stored transposed).
    """
    B = x_nchw.shape[0]
    x2d = x_nchw.reshape(B, IN_FEATURES)   # free view; streamed as-is (f32), cast in-kernel

    def round_up(a, m):
        return (a + m - 1) // m * m

    # Batch tile selection:
    #   * tiny batches: exact batch size (block == full array, always legal)
    #   * otherwise: multiple of 8, capped so the grid has >= 2 steps when possible
    #     (lets "parallel" shard batch tiles across the 2 TensorCores on v7x).
    if B <= 8:
        tile_b = B
    else:
        tile_b = max(8, min(tile_b, round_up(pl.cdiv(B, 2), 8)))
    grid = (pl.cdiv(B, tile_b),)   # ragged final block handled by Pallas (masked OOB writes)

    # Resident weights: bf16 for both matmuls (f32 accumulation), biases f32.
    w1_k = w1.astype(compute_dtype)
    b1_k = b1.reshape(1, HIDDEN).astype(jnp.float32)
    w2_k = w2.astype(compute_dtype)
    b2_k = b2.reshape(1, NUM_CLASSES).astype(jnp.float32)

    x_itemsize = x2d.dtype.itemsize
    cost = pl.CostEstimate(
        flops=2 * B * IN_FEATURES * HIDDEN + 2 * B * HIDDEN * NUM_CLASSES,
        transcendentals=B * NUM_CLASSES,
        bytes_accessed=(B * IN_FEATURES * x_itemsize        # streamed x (f32)
                        + B * NUM_CLASSES * 4               # f32 log-prob output
                        + IN_FEATURES * HIDDEN * 2          # w1 (bf16, resident)
                        + HIDDEN * NUM_CLASSES * 2          # w2 (bf16, resident)
                        + (HIDDEN + NUM_CLASSES) * 4),      # biases
    )

    # Scoped-VMEM budget from the actual footprint (double-buffered x dominates).
    vmem_bytes = (2 * tile_b * IN_FEATURES * x_itemsize     # double-buffered x stream
                  + tile_b * IN_FEATURES * 2                # in-kernel bf16 copy of x
                  + 2 * tile_b * NUM_CLASSES * 4            # double-buffered output
                  + (4 << 20))                              # weights + temporaries + headroom
    vmem_bytes = max(16 << 20, min(vmem_bytes, 56 << 20))   # headroom vs v7x's 64 MiB VMEM

    out = pl.pallas_call(
        mnist_kernel,
        out_shape=jax.ShapeDtypeStruct((B, NUM_CLASSES), jnp.float32),
        grid=grid,
        in_specs=[
            pl.BlockSpec((tile_b, IN_FEATURES), lambda i: (i, 0)),     # streamed x tiles
            pl.BlockSpec((IN_FEATURES, HIDDEN), lambda i: (0, 0)),     # resident w1
            pl.BlockSpec((1, HIDDEN), lambda i: (0, 0)),               # resident b1
            pl.BlockSpec((HIDDEN, NUM_CLASSES), lambda i: (0, 0)),     # resident w2
            pl.BlockSpec((1, NUM_CLASSES), lambda i: (0, 0)),          # resident b2
        ],
        out_specs=pl.BlockSpec((tile_b, NUM_CLASSES), lambda i: (i, 0)),
        compiler_params=pltpu.CompilerParams(
            dimension_semantics=("parallel",),   # batch tiles are independent
            vmem_limit_bytes=int(vmem_bytes),
        ),
        cost_estimate=cost,
    )(x2d, w1_k, b1_k, w2_k, b2_k)
    return out


def init_params(key):
    """Deterministic parameter init matching nn.Linear shapes (stored transposed)."""
    k1, k2, k3, k4 = jax.random.split(key, 4)
    lim1 = 1.0 / jnp.sqrt(784.0)
    w1 = jax.random.uniform(k1, (IN_FEATURES, HIDDEN), jnp.float32, -lim1, lim1)
    b1 = jax.random.uniform(k2, (1, HIDDEN), jnp.float32, -lim1, lim1)
    lim2 = 1.0 / jnp.sqrt(28.0)
    w2 = jax.random.uniform(k3, (HIDDEN, NUM_CLASSES), jnp.float32, -lim2, lim2)
    b2 = jax.random.uniform(k4, (1, NUM_CLASSES), jnp.float32, -lim2, lim2)
    return w1, b1, w2, b2


if __name__ == "__main__":
    key = jax.random.PRNGKey(0)
    kx, kp = jax.random.split(key)

    # Small deterministic input, MNIST-shaped NCHW: batch=2, 1 channel, 28x28
    x = jax.random.normal(kx, (2, 1, 28, 28), dtype=jnp.float32)
    w1, b1, w2, b2 = init_params(kp)

    out = mnist_forward(x, w1, b1, w2, b2)
    out = jax.block_until_ready(out)

    # Plain-JAX reference mirroring the in-kernel bf16 quantization of x/w1/h/w2.
    def q(a):
        return a.astype(jnp.bfloat16).astype(jnp.float32)

    x2d_ref = x.reshape(2, IN_FEATURES)
    h_ref = jnp.maximum(q(x2d_ref) @ q(w1) + b1, 0.0)
    logits_ref = q(h_ref) @ q(w2) + b2
    ref = jax.nn.log_softmax(logits_ref, axis=-1)

    assert out.shape == (2, NUM_CLASSES)
    assert jnp.allclose(out, ref, atol=2e-2, rtol=1e-2)

    print("KERNEL_OK")
</pallas_src>

<mosaic_0001>
module attributes {stable_mosaic.version = 11 : i64} {
  func.func @mnist_kernel(%arg0: i32, %arg1: memref<2x784xf32, #tpu.memory_space<vmem>>, %arg2: memref<784x28xbf16, #tpu.memory_space<vmem>>, %arg3: memref<1x28xf32, #tpu.memory_space<vmem>>, %arg4: memref<28x10xbf16, #tpu.memory_space<vmem>>, %arg5: memref<1x10xf32, #tpu.memory_space<vmem>>, %arg6: memref<2x10xf32, #tpu.memory_space<vmem>>) attributes {dimension_semantics = [#tpu.dimension_semantics<parallel>], iteration_bounds = array<i64: 1>, scalar_prefetch = 0 : i64, scratch_operands = 0 : i64, tpu.core_type = #tpu.core_type<tc>, window_params = [{transform_indices = @transform_0, window_bounds = array<i64: 2, 784>}, {pipeline_mode = #tpu.pipeline_mode<synchronous>, transform_indices = @transform_1, window_bounds = array<i64: 784, 28>}, {pipeline_mode = #tpu.pipeline_mode<synchronous>, transform_indices = @transform_2, window_bounds = array<i64: 1, 28>}, {pipeline_mode = #tpu.pipeline_mode<synchronous>, transform_indices = @transform_3, window_bounds = array<i64: 28, 10>}, {pipeline_mode = #tpu.pipeline_mode<synchronous>, transform_indices = @transform_4, window_bounds = array<i64: 1, 10>}, {transform_indices = @transform_5, window_bounds = array<i64: 2, 10>}]} {
    %c0 = arith.constant 0 : index
    %c0_0 = arith.constant 0 : index
    %0 = vector.load %arg1[%c0, %c0_0] : memref<2x784xf32, #tpu.memory_space<vmem>>, vector<2x784xf32>
    %1 = arith.truncf %0 : vector<2x784xf32> to vector<2x784xbf16>
    %c0_1 = arith.constant 0 : index
    %c0_2 = arith.constant 0 : index
    %2 = vector.load %arg2[%c0_1, %c0_2] : memref<784x28xbf16, #tpu.memory_space<vmem>>, vector<784x28xbf16>
    %cst = arith.constant dense<0.000000e+00> : vector<2x28xf32>
    %3 = tpu.matmul %1, %2, %cst {dimension_numbers = #tpu.dot_dimension_numbers<[1], [0], [0], [1], [0, 0, 1, 1], [], []>} : vector<2x784xbf16>, vector<784x28xbf16>, vector<2x28xf32> -> vector<2x28xf32>
    %c0_3 = arith.constant 0 : index
    %c0_4 = arith.constant 0 : index
    %4 = vector.load %arg3[%c0_3, %c0_4] : memref<1x28xf32, #tpu.memory_space<vmem>>, vector<1x28xf32>
    %5 = vector.broadcast %4 : vector<1x28xf32> to vector<2x28xf32>
    %6 = arith.addf %3, %5 : vector<2x28xf32>
    %cst_5 = arith.constant 0.000000e+00 : f32
    %7 = vector.broadcast %cst_5 : f32 to vector<2x28xf32>
    %8 = arith.maximumf %6, %7 : vector<2x28xf32>
    %9 = arith.truncf %8 : vector<2x28xf32> to vector<2x28xbf16>
    %c0_6 = arith.constant 0 : index
    %c0_7 = arith.constant 0 : index
    %10 = vector.load %arg4[%c0_6, %c0_7] : memref<28x10xbf16, #tpu.memory_space<vmem>>, vector<28x10xbf16>
    %cst_8 = arith.constant dense<0.000000e+00> : vector<2x10xf32>
    %11 = tpu.matmul %9, %10, %cst_8 {dimension_numbers = #tpu.dot_dimension_numbers<[1], [0], [0], [1], [0, 0, 1, 1], [], []>} : vector<2x28xbf16>, vector<28x10xbf16>, vector<2x10xf32> -> vector<2x10xf32>
    %c0_9 = arith.constant 0 : index
    %c0_10 = arith.constant 0 : index
    %12 = vector.load %arg5[%c0_9, %c0_10] : memref<1x10xf32, #tpu.memory_space<vmem>>, vector<1x10xf32>
    %13 = vector.broadcast %12 : vector<1x10xf32> to vector<2x10xf32>
    %14 = arith.addf %11, %13 : vector<2x10xf32>
    %cst_11 = arith.constant dense<0xFF800000> : vector<2xf32>
    %15 = vector.multi_reduction <maximumf>, %14, %cst_11 [1] : vector<2x10xf32> to vector<2xf32>
    %16 = vector.shape_cast %15 : vector<2xf32> to vector<2x1xf32>
    %17 = vector.broadcast %16 : vector<2x1xf32> to vector<2x10xf32>
    %18 = arith.subf %14, %17 : vector<2x10xf32>
    %19 = math.exp %18 : vector<2x10xf32>
    %cst_12 = arith.constant dense<0.000000e+00> : vector<2xf32>
    %20 = vector.multi_reduction <add>, %19, %cst_12 [1] : vector<2x10xf32> to vector<2xf32>
    %21 = vector.shape_cast %20 : vector<2xf32> to vector<2x1xf32>
    %22 = math.log %21 : vector<2x1xf32>
    %23 = vector.broadcast %22 : vector<2x1xf32> to vector<2x10xf32>
    %24 = arith.subf %18, %23 : vector<2x10xf32>
    %c0_13 = arith.constant 0 : index
    %c0_14 = arith.constant 0 : index
    %25 = vector.load %arg6[%c0_13, %c0_14] : memref<2x10xf32, #tpu.memory_space<vmem>>, vector<2x10xf32>
    tpu.vector_store %arg6[%c0_13, %c0_14], %24 {strides = array<i32>} : memref<2x10xf32, #tpu.memory_space<vmem>>, vector<2x10xf32>,
    return
  }
  func.func @transform_0(%arg0: i32) -> (i32, i32) {
    %c0_i32 = arith.constant 0 : i32
    %c0_i32_0 = arith.constant 0 : i32
    return %arg0, %c0_i32 : i32, i32
  }
  func.func @transform_1(%arg0: i32) -> (i32, i32) {
    %c0_i32 = arith.constant 0 : i32
    %c0_i32_0 = arith.constant 0 : i32
    %c0_i32_1 = arith.constant 0 : i32
    return %c0_i32, %c0_i32_0 : i32, i32
  }
  func.func @transform_2(%arg0: i32) -> (i32, i32) {
    %c0_i32 = arith.constant 0 : i32
    %c0_i32_0 = arith.constant 0 : i32
    %c0_i32_1 = arith.constant 0 : i32
    return %c0_i32, %c0_i32_0 : i32, i32
  }
  func.func @transform_3(%arg0: i32) -> (i32, i32) {
    %c0_i32 = arith.constant 0 : i32
    %c0_i32_0 = arith.constant 0 : i32
    %c0_i32_1 = arith.constant 0 : i32
    return %c0_i32, %c0_i32_0 : i32, i32
  }
  func.func @transform_4(%arg0: i32) -> (i32, i32) {
    %c0_i32 = arith.constant 0 : i32
    %c0_i32_0 = arith.constant 0 : i32
    %c0_i32_1 = arith.constant 0 : i32
    return %c0_i32, %c0_i32_0 : i32, i32
  }
  func.func @transform_5(%arg0: i32) -> (i32, i32) {
    %c0_i32 = arith.constant 0 : i32
    %c0_i32_0 = arith.constant 0 : i32
    return %arg0, %c0_i32 : i32, i32
  }
}

</mosaic_0001>

<llo_original>
// kernel: tpu_custom_call.1
$region0: #{tpu_custom_call.1}
  #allocation0 [shape = 'u32[]', space=smem, size = 0x4, offset = 0x4, fixed_abs, tag = 'smem constant byte address 0x4 - core index']
  #allocation1 [shape = 'u32[144,128]{1,0:T(1,128)}', space=vmem, size = 0x12000, scoped, tag = 'internal scratch']
  %s0 = inlined_call_operand.vmem [shape: f32[2,784], index: 0, kind: input, shape index: {}]
  %s1 = inlined_call_operand.vmem [shape: bf16[784,28], index: 1, kind: input, shape index: {}]
  %s2 = inlined_call_operand.vmem [shape: f32[1,28], index: 2, kind: input, shape index: {}]
  %s3 = inlined_call_operand.vmem [shape: bf16[28,10], index: 3, kind: input, shape index: {}]
  %s4 = inlined_call_operand.vmem [shape: f32[1,10], index: 4, kind: input, shape index: {}]
  %s5 = inlined_call_operand.hbm [shape: f32[2,10], index: 5, kind: output, shape index: {}]
  %s6 = sld [smem:[#allocation0]]
  $region30: #{tpu_custom_call.1} parent=0
    _
  %s8 = ssub.s32 1, %s6
  %s9 = scalar_select 0, %s8, %s6
  $region1: #{tpu_custom_call.1} parent=0
    #allocation2 [shape = 'u8[1024]{0}', space=vmem, size = 0x400, scoped, tag = 'output window, operand 0, single buffered']
    #allocation3 [shape = 's32[1]{0}', space=sflag, size = 0x4, scoped, tag = 'scoped memory for tpu_custom_call.1']
    %10 = vsyncpa [#allocation3], 0
    // Predicated region
    $region2: #{tpu_custom_call.1} parent=1 // pred_check
      _
    $region3: #{tpu_custom_call.1} parent=1 // pred_check_branch
      %12 = sbr.rel (0) target = $region5
    $region4: #{tpu_custom_call.1} parent=1 // pred_region
      _
    $region5: #{tpu_custom_call.1} parent=1 // pred_fallthru
      _
    // Predicated region
    $region6: #{tpu_custom_call.1} parent=1 // pred_check
      _
    $region7: #{tpu_custom_call.1} parent=1 // pred_check_branch
      %14 = sbr.rel (0) target = $region9
    $region8: #{tpu_custom_call.1} parent=1 // pred_region
      _
    $region9: #{tpu_custom_call.1} parent=1 // pred_fallthru
      _
    // Predicated region
    $region10: #{tpu_custom_call.1} parent=1 // pred_check
      _
    $region11: #{tpu_custom_call.1} parent=1 // pred_check_branch
      %16 = sbr.rel (0) target = $region13
    $region12: #{tpu_custom_call.1} parent=1 // pred_region
      _
    $region13: #{tpu_custom_call.1} parent=1 // pred_fallthru
      _
    // Predicated region
    $region14: #{tpu_custom_call.1} parent=1 // pred_check
      _
    $region15: #{tpu_custom_call.1} parent=1 // pred_check_branch
      %18 = sbr.rel (0) target = $region17
    $region16: #{tpu_custom_call.1} parent=1 // pred_region
      _
    $region17: #{tpu_custom_call.1} parent=1 // pred_fallthru
      _
    // Predicated region
    $region18: #{tpu_custom_call.1} parent=1 // pred_check
      _
    $region19: #{tpu_custom_call.1} parent=1 // pred_check_branch
      %20 = sbr.rel (0) target = $region21
    $region20: #{tpu_custom_call.1} parent=1 // pred_region
      _
    $region21: #{tpu_custom_call.1} parent=1 // pred_fallthru
      _
    %v22 = vld [vmem:[%s0] sm:$0xff]
    %v23 = vld [vmem:[%s0 + $0x8] sm:$0x3f]
    %v26 = vcombine.high %v22, %v22
    %v28 = vunpack.c.l.s4 1983009808
    %v29 = vunpack.c.0.s8 %v28
    %v30 = vlaneseq
    %v31 = vshrl.u32 %v30, 7
    %v32 = vsub.s32 %v29, %v31
    %v33 = vrot.slane %v22, %v32
    %v35 = vunpack.c.l.s4 1983009808
    %v36 = vunpack.c.0.s8 %v35
    %v37 = vlaneseq
    %v38 = vshrl.u32 %v37, 7
    %v39 = vsub.s32 %v36, %v38
    %v40 = vrot.slane %v26, %v39
    %v41 = vcombine.high %v33, %v33
    %v42 = vcombine.high %v40, %v40
    %v43 = vcombine.high %v23, %v23
    %v45 = vunpack.c.l.s4 1983009808
    %v46 = vunpack.c.0.s8 %v45
    %v47 = vlaneseq
    %v48 = vshrl.u32 %v47, 7
    %v49 = vsub.s32 %v46, %v48
    %v50 = vrot.slane %v23, %v49
    %v52 = vunpack.c.l.s4 1983009808
    %v53 = vunpack.c.0.s8 %v52
    %v54 = vlaneseq
    %v55 = vshrl.u32 %v54, 7
    %v56 = vsub.s32 %v53, %v55
    %v57 = vrot.slane %v43, %v56
    %v58 = vcombine.high %v50, %v50
    %v66 = vpack.c.bf16 %v33, %v33
    %v67 = vpack.c.bf16 %v41, %v41
    %v68 = vpack.c.bf16 %v40, %v40
    %v69 = vpack.c.bf16 %v42, %v42
    %v70 = vpack.c.bf16 %v50, %v50
    %v71 = vpack.c.bf16 %v58, %v58
    %v72 = vpack.c.bf16 %v57, %v57
    %v73 = vld [vmem:[%s1] sm:$0xf]
    %v74 = vld [vmem:[%s1 + $0x4] sm:$0xf]
    %v75 = vld [vmem:[%s1 + $0x8] sm:$0xf]
    %v76 = vld [vmem:[%s1 + $0xc] sm:$0xf]
    %v77 = vld [vmem:[%s1 + $0x10] sm:$0xf]
    %v78 = vld [vmem:[%s1 + $0x14] sm:$0xf]
    %v79 = vld [vmem:[%s1 + $0x18] sm:$0xf]
    %v80 = vld [vmem:[%s1 + $0x1c] sm:$0xf]
    %v81 = vld [vmem:[%s1 + $0x20] sm:$0xf]
    %v82 = vld [vmem:[%s1 + $0x24] sm:$0xf]
    %v83 = vld [vmem:[%s1 + $0x28] sm:$0xf]
    %v84 = vld [vmem:[%s1 + $0x2c] sm:$0xf]
    %v85 = vld [vmem:[%s1 + $0x30] sm:$0xf]
    %v86 = vld [vmem:[%s1 + $0x34] sm:$0xf]
    %v87 = vld [vmem:[%s1 + $0x38] sm:$0xf]
    %v88 = vld [vmem:[%s1 + $0x3c] sm:$0xf]
    %v89 = vld [vmem:[%s1 + $0x40] sm:$0xf]
    %v90 = vld [vmem:[%s1 + $0x44] sm:$0xf]
    %v91 = vld [vmem:[%s1 + $0x48] sm:$0xf]
    %v92 = vld [vmem:[%s1 + $0x4c] sm:$0xf]
    %v93 = vld [vmem:[%s1 + $0x50] sm:$0xf]
    %v94 = vld [vmem:[%s1 + $0x54] sm:$0xf]
    %v95 = vld [vmem:[%s1 + $0x58] sm:$0xf]
    %v96 = vld [vmem:[%s1 + $0x5c] sm:$0xf]
    %v97 = vld [vmem:[%s1 + $0x60] sm:$0xf]
    %v98 = vld [vmem:[%s1 + $0x64] sm:$0xf]
    %v99 = vld [vmem:[%s1 + $0x68] sm:$0xf]
    %v100 = vld [vmem:[%s1 + $0x6c] sm:$0xf]
    %v101 = vld [vmem:[%s1 + $0x70] sm:$0xf]
    %v102 = vld [vmem:[%s1 + $0x74] sm:$0xf]
    %v103 = vld [vmem:[%s1 + $0x78] sm:$0xf]
    %v104 = vld [vmem:[%s1 + $0x7c] sm:$0xf]
    %v105 = vld [vmem:[%s1 + $0x80] sm:$0xf]
    %v106 = vld [vmem:[%s1 + $0x84] sm:$0xf]
    %v107 = vld [vmem:[%s1 + $0x88] sm:$0xf]
    %v108 = vld [vmem:[%s1 + $0x8c] sm:$0xf]
    %v109 = vld [vmem:[%s1 + $0x90] sm:$0xf]
    %v110 = vld [vmem:[%s1 + $0x94] sm:$0xf]
    %v111 = vld [vmem:[%s1 + $0x98] sm:$0xf]
    %v112 = vld [vmem:[%s1 + $0x9c] sm:$0xf]
    %v113 = vld [vmem:[%s1 + $0xa0] sm:$0xf]
    %v114 = vld [vmem:[%s1 + $0xa4] sm:$0xf]
    %v115 = vld [vmem:[%s1 + $0xa8] sm:$0xf]
    %v116 = vld [vmem:[%s1 + $0xac] sm:$0xf]
    %v117 = vld [vmem:[%s1 + $0xb0] sm:$0xf]
    %v118 = vld [vmem:[%s1 + $0xb4] sm:$0xf]
    %v119 = vld [vmem:[%s1 + $0xb8] sm:$0xf]
    %v120 = vld [vmem:[%s1 + $0xbc] sm:$0xf]
    %v121 = vld [vmem:[%s1 + $0xc0] sm:$0xf]
    %v122 = vld [vmem:[%s1 + $0xc4] sm:$0xf]
    %v123 = vld [vmem:[%s1 + $0xc8] sm:$0xf]
    %v124 = vld [vmem:[%s1 + $0xcc] sm:$0xf]
    %v125 = vld [vmem:[%s1 + $0xd0] sm:$0xf]
    %v126 = vld [vmem:[%s1 + $0xd4] sm:$0xf]
    %v127 = vld [vmem:[%s1 + $0xd8] sm:$0xf]
    %v128 = vld [vmem:[%s1 + $0xdc] sm:$0xf]
    %v129 = vld [vmem:[%s1 + $0xe0] sm:$0xf]
    %v130 = vld [vmem:[%s1 + $0xe4] sm:$0xf]
    %v131 = vld [vmem:[%s1 + $0xe8] sm:$0xf]
    %v132 = vld [vmem:[%s1 + $0xec] sm:$0xf]
    %v133 = vld [vmem:[%s1 + $0xf0] sm:$0xf]
    %v134 = vld [vmem:[%s1 + $0xf4] sm:$0xf]
    %v135 = vld [vmem:[%s1 + $0xf8] sm:$0xf]
    %v136 = vld [vmem:[%s1 + $0xfc] sm:$0xf]
    %v137 = vld [vmem:[%s1 + $0x100] sm:$0xf]
    %v138 = vld [vmem:[%s1 + $0x104] sm:$0xf]
    %v139 = vld [vmem:[%s1 + $0x108] sm:$0xf]
    %v140 = vld [vmem:[%s1 + $0x10c] sm:$0xf]
    %v141 = vld [vmem:[%s1 + $0x110] sm:$0xf]
    %v142 = vld [vmem:[%s1 + $0x114] sm:$0xf]
    %v143 = vld [vmem:[%s1 + $0x118] sm:$0xf]
    %v144 = vld [vmem:[%s1 + $0x11c] sm:$0xf]
    %v145 = vld [vmem:[%s1 + $0x120] sm:$0xf]
    %v146 = vld [vmem:[%s1 + $0x124] sm:$0xf]
    %v147 = vld [vmem:[%s1 + $0x128] sm:$0xf]
    %v148 = vld [vmem:[%s1 + $0x12c] sm:$0xf]
    %v149 = vld [vmem:[%s1 + $0x130] sm:$0xf]
    %v150 = vld [vmem:[%s1 + $0x134] sm:$0xf]
    %v151 = vld [vmem:[%s1 + $0x138] sm:$0xf]
    %v152 = vld [vmem:[%s1 + $0x13c] sm:$0xf]
    %v153 = vld [vmem:[%s1 + $0x140] sm:$0xf]
    %v154 = vld [vmem:[%s1 + $0x144] sm:$0xf]
    %v155 = vld [vmem:[%s1 + $0x148] sm:$0xf]
    %v156 = vld [vmem:[%s1 + $0x14c] sm:$0xf]
    %v157 = vld [vmem:[%s1 + $0x150] sm:$0xf]
    %v158 = vld [vmem:[%s1 + $0x154] sm:$0xf]
    %v159 = vld [vmem:[%s1 + $0x158] sm:$0xf]
    %v160 = vld [vmem:[%s1 + $0x15c] sm:$0xf]
    %v161 = vld [vmem:[%s1 + $0x160] sm:$0xf]
    %v162 = vld [vmem:[%s1 + $0x164] sm:$0xf]
    %v163 = vld [vmem:[%s1 + $0x168] sm:$0xf]
    %v164 = vld [vmem:[%s1 + $0x16c] sm:$0xf]
    %v165 = vld [vmem:[%s1 + $0x170] sm:$0xf]
    %v166 = vld [vmem:[%s1 + $0x174] sm:$0xf]
    %v167 = vld [vmem:[%s1 + $0x178] sm:$0xf]
    %v168 = vld [vmem:[%s1 + $0x17c] sm:$0xf]
    %v169 = vld [vmem:[%s1 + $0x180] sm:$0xf]
    %v170 = vld [vmem:[%s1 + $0x184] sm:$0xf]
    %v171 = vld [vmem:[%s2] sm:$0x1]
    %v173 = vlaneseq
    %v174 = vshrl.u32 %v173, 7
    %v175 = vsub.s32 0, %v174
    %v176 = vrot.slane %v171, %v175
    %v276 = vunpack.c.l.b16 %v73
    %v277 = vunpack.c.l.b16 %v74
    %v278 = vunpack.c.l.b16 %v75
    %v279 = vunpack.c.l.b16 %v76
    %v280 = vunpack.c.l.b16 %v77
    %v281 = vunpack.c.l.b16 %v78
    %v282 = vunpack.c.l.b16 %v79
    %v283 = vunpack.c.l.b16 %v80
    %v284 = vunpack.c.l.b16 %v81
    %v285 = vunpack.c.l.b16 %v82
    %v286 = vunpack.c.l.b16 %v83
    %v287 = vunpack.c.l.b16 %v84
    %v288 = vunpack.c.l.b16 %v85
    %v289 = vunpack.c.l.b16 %v86
    %v290 = vunpack.c.l.b16 %v87
    %v291 = vunpack.c.l.b16 %v88
    %v292 = vunpack.c.l.b16 %v89
    %v293 = vunpack.c.l.b16 %v90
    %v294 = vunpack.c.l.b16 %v91
    %v295 = vunpack.c.l.b16 %v92
    %v296 = vunpack.c.l.b16 %v93
    %v297 = vunpack.c.l.b16 %v94
    %v298 = vunpack.c.l.b16 %v95
    %v299 = vunpack.c.l.b16 %v96
    %v300 = vunpack.c.l.b16 %v97
    %v301 = vunpack.c.l.b16 %v98
    %v302 = vunpack.c.l.b16 %v99
    %v303 = vunpack.c.l.b16 %v100
    %v304 = vunpack.c.l.b16 %v101
    %v305 = vunpack.c.l.b16 %v102
    %v306 = vunpack.c.l.b16 %v103
    %v307 = vunpack.c.l.b16 %v104
    %v308 = vunpack.c.l.b16 %v105
    %v309 = vunpack.c.l.b16 %v106
    %v310 = vunpack.c.l.b16 %v107
    %v311 = vunpack.c.l.b16 %v108
    %v312 = vunpack.c.l.b16 %v109
    %v313 = vunpack.c.l.b16 %v110
    %v314 = vunpack.c.l.b16 %v111
    %v315 = vunpack.c.l.b16 %v112
    %v316 = vunpack.c.l.b16 %v113
    %v317 = vunpack.c.l.b16 %v114
    %v318 = vunpack.c.l.b16 %v115
    %v319 = vunpack.c.l.b16 %v116
    %v320 = vunpack.c.l.b16 %v117
    %v321 = vunpack.c.l.b16 %v118
    %v322 = vunpack.c.l.b16 %v119
    %v323 = vunpack.c.l.b16 %v120
    %v324 = vunpack.c.l.b16 %v121
    %v325 = vunpack.c.l.b16 %v122
    %v326 = vunpack.c.l.b16 %v123
    %v327 = vunpack.c.l.b16 %v124
    %v328 = vunpack.c.l.b16 %v125
    %v329 = vunpack.c.l.b16 %v126
    %v330 = vunpack.c.l.b16 %v127
    %v331 = vunpack.c.l.b16 %v128
    %v332 = vunpack.c.l.b16 %v129
    %v333 = vunpack.c.l.b16 %v130
    %v334 = vunpack.c.l.b16 %v131
    %v335 = vunpack.c.l.b16 %v132
    %v336 = vunpack.c.l.b16 %v133
    %v337 = vunpack.c.l.b16 %v134
    %v338 = vunpack.c.l.b16 %v135
    %v339 = vunpack.c.l.b16 %v136
    %v340 = vunpack.c.l.b16 %v137
    %v341 = vunpack.c.l.b16 %v138
    %v342 = vunpack.c.l.b16 %v139
    %v343 = vunpack.c.l.b16 %v140
    %v344 = vunpack.c.l.b16 %v141
    %v345 = vunpack.c.l.b16 %v142
    %v346 = vunpack.c.l.b16 %v143
    %v347 = vunpack.c.l.b16 %v144
    %v348 = vunpack.c.l.b16 %v145
    %v349 = vunpack.c.l.b16 %v146
    %v350 = vunpack.c.l.b16 %v147
    %v351 = vunpack.c.l.b16 %v148
    %v352 = vunpack.c.l.b16 %v149
    %v353 = vunpack.c.l.b16 %v150
    %v354 = vunpack.c.l.b16 %v151
    %v355 = vunpack.c.l.b16 %v152
    %v356 = vunpack.c.l.b16 %v153
    %v357 = vunpack.c.l.b16 %v154
    %v358 = vunpack.c.l.b16 %v155
    %v359 = vunpack.c.l.b16 %v156
    %v360 = vunpack.c.l.b16 %v157
    %v361 = vunpack.c.l.b16 %v158
    %v362 = vunpack.c.l.b16 %v159
    %v363 = vunpack.c.l.b16 %v160
    %v364 = vunpack.c.l.b16 %v161
    %v365 = vunpack.c.l.b16 %v162
    %v366 = vunpack.c.l.b16 %v163
    %v367 = vunpack.c.l.b16 %v164
    %v368 = vunpack.c.l.b16 %v165
    %v369 = vunpack.c.l.b16 %v166
    %v370 = vunpack.c.l.b16 %v167
    %v371 = vunpack.c.l.b16 %v168
    %v372 = vunpack.c.l.b16 %v169
    %v373 = vunpack.c.l.b16 %v170
    %v374 = vpack.c.b16 %v277, %v276
    %v375 = vpack.c.b16 %v279, %v278
    %v376 = vpack.c.b16 %v281, %v280
    %v377 = vpack.c.b16 %v283, %v282
    %v378 = vpack.c.b16 %v285, %v284
    %v379 = vpack.c.b16 %v287, %v286
    %v380 = vpack.c.b16 %v289, %v288
    %v381 = vpack.c.b16 %v291, %v290
    %v382 = vpack.c.b16 %v293, %v292
    %v383 = vpack.c.b16 %v295, %v294
    %v384 = vpack.c.b16 %v297, %v296
    %v385 = vpack.c.b16 %v299, %v298
    %v386 = vpack.c.b16 %v301, %v300
    %v387 = vpack.c.b16 %v303, %v302
    %v388 = vpack.c.b16 %v305, %v304
    %v389 = vpack.c.b16 %v307, %v306
    %v390 = vpack.c.b16 %v309, %v308
    %v391 = vpack.c.b16 %v311, %v310
    %v392 = vpack.c.b16 %v313, %v312
    %v393 = vpack.c.b16 %v315, %v314
    %v394 = vpack.c.b16 %v317, %v316
    %v395 = vpack.c.b16 %v319, %v318
    %v396 = vpack.c.b16 %v321, %v320
    %v397 = vpack.c.b16 %v323, %v322
    %v398 = vpack.c.b16 %v325, %v324
    %v399 = vpack.c.b16 %v327, %v326
    %v400 = vpack.c.b16 %v329, %v328
    %v401 = vpack.c.b16 %v331, %v330
    %v402 = vpack.c.b16 %v333, %v332
    %v403 = vpack.c.b16 %v335, %v334
    %v404 = vpack.c.b16 %v337, %v336
    %v405 = vpack.c.b16 %v339, %v338
    %v406 = vpack.c.b16 %v341, %v340
    %v407 = vpack.c.b16 %v343, %v342
    %v408 = vpack.c.b16 %v345, %v344
    %v409 = vpack.c.b16 %v347, %v346
    %v410 = vpack.c.b16 %v349, %v348
    %v411 = vpack.c.b16 %v351, %v350
    %v412 = vpack.c.b16 %v353, %v352
    %v413 = vpack.c.b16 %v355, %v354
    %v414 = vpack.c.b16 %v357, %v356
    %v415 = vpack.c.b16 %v359, %v358
    %v416 = vpack.c.b16 %v361, %v360
    %v417 = vpack.c.b16 %v363, %v362
    %v418 = vpack.c.b16 %v365, %v364
    %v419 = vpack.c.b16 %v367, %v366
    %v420 = vpack.c.b16 %v369, %v368
    %v421 = vpack.c.b16 %v371, %v370
    %v422 = vpack.c.b16 %v373, %v372
    %vm472 = vcmask 130048
    %v474 = vsel %vm472, %v72, 0
    %476 = vmatprep.subr.bf16.mxu0 0
    %477 = vmatpush1.bf16.msra.mxu0 %v374
    %478 = vmatprep.subr.bf16.mxu0 0
    %479 = vmatpush1.bf16.msra.mxu0 %v375
    %480 = vmatprep.subr.bf16.mxu0 0
    %481 = vmatpush1.bf16.msra.mxu0 %v376
    %482 = vmatprep.subr.bf16.mxu0 0
    %483 = vmatpush1.bf16.msra.mxu0 %v377
    %484 = vmatprep.subr.bf16.mxu0 0
    %485 = vmatpush1.bf16.msra.mxu0 %v378
    %486 = vmatprep.subr.bf16.mxu0 0
    %487 = vmatpush1.bf16.msra.mxu0 %v379
    %488 = vmatprep.subr.bf16.mxu0 0
    %489 = vmatpush1.bf16.msra.mxu0 %v380
    %490 = vmatprep.subr.bf16.mxu0 0
    %491 = vmatpush1.bf16.msra.mxu0 %v381
    %492 = vmatprep.subr.bf16.mxu0 0
    %493 = vmatpush1.bf16.msra.mxu0 %v382
    %494 = vmatprep.subr.bf16.mxu0 0
    %495 = vmatpush1.bf16.msra.mxu0 %v383
    %496 = vmatprep.subr.bf16.mxu0 0
    %497 = vmatpush1.bf16.msra.mxu0 %v384
    %498 = vmatprep.subr.bf16.mxu0 0
    %499 = vmatpush1.bf16.msra.mxu0 %v385
    %500 = vmatprep.subr.bf16.mxu0 0
    %501 = vmatpush1.bf16.msra.mxu0 %v386
    %502 = vmatprep.subr.bf16.mxu0 0
    %503 = vmatpush1.bf16.msra.mxu0 %v387
    %504 = vmatprep.subr.bf16.mxu0 0
    %505 = vmatpush1.bf16.msra.mxu0 %v388
    %506 = vmatprep.subr.bf16.mxu0 0
    %507 = vmatpush1.bf16.msra.mxu0 %v389
    %508 = vmatprep.mubr.bf16.mxu0 %v67
    %509 = vmatmul.mubr.bf16.gmra.mrb[0].mxu0 %v66
    %v510 = vpop.f32.mrb[0].mxu0
    %v511 = vadd.f32 %v176, %v510
    %v512 = vpop.f32.mrb[0].mxu0
    %v513 = vpop.f32.mrb[0].mxu0
    %v514 = vpop.f32.mrb[0].mxu0
    %515 = vdwg.mxu0
    %516 = vmatprep.subr.bf16.mxu0 0
    %517 = vmatpush1.bf16.msra.mxu0 %v390
    %518 = vmatprep.subr.bf16.mxu0 0
    %519 = vmatpush1.bf16.msra.mxu0 %v391
    %520 = vmatprep.subr.bf16.mxu0 0
    %521 = vmatpush1.bf16.msra.mxu0 %v392
    %522 = vmatprep.subr.bf16.mxu0 0
    %523 = vmatpush1.bf16.msra.mxu0 %v393
    %524 = vmatprep.subr.bf16.mxu0 0
    %525 = vmatpush1.bf16.msra.mxu0 %v394
    %526 = vmatprep.subr.bf16.mxu0 0
    %527 = vmatpush1.bf16.msra.mxu0 %v395
    %528 = vmatprep.subr.bf16.mxu0 0
    %529 = vmatpush1.bf16.msra.mxu0 %v396
    %530 = vmatprep.subr.bf16.mxu0 0
    %531 = vmatpush1.bf16.msra.mxu0 %v397
    %532 = vmatprep.subr.bf16.mxu0 0
    %533 = vmatpush1.bf16.msra.mxu0 %v398
    %534 = vmatprep.subr.bf16.mxu0 0
    %535 = vmatpush1.bf16.msra.mxu0 %v399
    %536 = vmatprep.subr.bf16.mxu0 0
    %537 = vmatpush1.bf16.msra.mxu0 %v400
    %538 = vmatprep.subr.bf16.mxu0 0
    %539 = vmatpush1.bf16.msra.mxu0 %v401
    %540 = vmatprep.subr.bf16.mxu0 0
    %541 = vmatpush1.bf16.msra.mxu0 %v402
    %542 = vmatprep.subr.bf16.mxu0 0
    %543 = vmatpush1.bf16.msra.mxu0 %v403
    %544 = vmatprep.subr.bf16.mxu0 0
    %545 = vmatpush1.bf16.msra.mxu0 %v404
    %546 = vmatprep.subr.bf16.mxu0 0
    %547 = vmatpush1.bf16.msra.mxu0 %v405
    %548 = vmatprep.mubr.bf16.mxu0 %v69
    %549 = vmatmul.mubr.bf16.gmra.mrb[0].mxu0 %v68
    %v550 = vpop.f32.mrb[0].mxu0
    %v551 = vadd.f32 %v511, %v550
    %v552 = vpop.f32.mrb[0].mxu0
    %v553 = vpop.f32.mrb[0].mxu0
    %v554 = vpop.f32.mrb[0].mxu0
    %555 = vdwg.mxu0
    %556 = vmatprep.subr.bf16.mxu0 0
    %557 = vmatpush1.bf16.msra.mxu0 %v406
    %558 = vmatprep.subr.bf16.mxu0 0
    %559 = vmatpush1.bf16.msra.mxu0 %v407
    %560 = vmatprep.subr.bf16.mxu0 0
    %561 = vmatpush1.bf16.msra.mxu0 %v408
    %562 = vmatprep.subr.bf16.mxu0 0
    %563 = vmatpush1.bf16.msra.mxu0 %v409
    %564 = vmatprep.subr.bf16.mxu0 0
    %565 = vmatpush1.bf16.msra.mxu0 %v410
    %566 = vmatprep.subr.bf16.mxu0 0
    %567 = vmatpush1.bf16.msra.mxu0 %v411
    %568 = vmatprep.subr.bf16.mxu0 0
    %569 = vmatpush1.bf16.msra.mxu0 %v412
    %570 = vmatprep.subr.bf16.mxu0 0
    %571 = vmatpush1.bf16.msra.mxu0 %v413
    %572 = vmatprep.subr.bf16.mxu0 0
    %573 = vmatpush1.bf16.msra.mxu0 %v414
    %574 = vmatprep.subr.bf16.mxu0 0
    %575 = vmatpush1.bf16.msra.mxu0 %v415
    %576 = vmatprep.subr.bf16.mxu0 0
    %577 = vmatpush1.bf16.msra.mxu0 %v416
    %578 = vmatprep.subr.bf16.mxu0 0
    %579 = vmatpush1.bf16.msra.mxu0 %v417
    %580 = vmatprep.subr.bf16.mxu0 0
    %581 = vmatpush1.bf16.msra.mxu0 %v418
    %582 = vmatprep.subr.bf16.mxu0 0
    %583 = vmatpush1.bf16.msra.mxu0 %v419
    %584 = vmatprep.subr.bf16.mxu0 0
    %585 = vmatpush1.bf16.msra.mxu0 %v420
    %586 = vmatprep.subr.bf16.mxu0 0
    %587 = vmatpush1.bf16.msra.mxu0 %v421
    %588 = vmatprep.mubr.bf16.mxu0 %v71
    %589 = vmatmul.mubr.bf16.gmra.mrb[0].mxu0 %v70
    %v590 = vpop.f32.mrb[0].mxu0
    %v591 = vadd.f32 %v551, %v590
    %v592 = vpop.f32.mrb[0].mxu0
    %v593 = vpop.f32.mrb[0].mxu0
    %v594 = vpop.f32.mrb[0].mxu0
    %595 = vdwg.mxu0
    %596 = vmatprep.subr.bf16.mxu0 0
    %597 = vmatpush1.bf16.msra.mxu0 %v422
    %598 = vmatprep.subr.bf16.mxu0 0
    %599 = vmatpush1.bf16.msra.mxu0 0
    %600 = vmatprep.subr.bf16.mxu0 0
    %601 = vmatpush1.bf16.msra.mxu0 0
    %602 = vmatprep.subr.bf16.mxu0 0
    %603 = vmatpush1.bf16.msra.mxu0 0
    %604 = vmatprep.subr.bf16.mxu0 0
    %605 = vmatpush1.bf16.msra.mxu0 0
    %606 = vmatprep.subr.bf16.mxu0 0
    %607 = vmatpush1.bf16.msra.mxu0 0
    %608 = vmatprep.subr.bf16.mxu0 0
    %609 = vmatpush1.bf16.msra.mxu0 0
    %610 = vmatprep.subr.bf16.mxu0 0
    %611 = vmatpush1.bf16.msra.mxu0 0
    %612 = vmatprep.subr.bf16.mxu0 0
    %613 = vmatpush1.bf16.msra.mxu0 0
    %614 = vmatprep.subr.bf16.mxu0 0
    %615 = vmatpush1.bf16.msra.mxu0 0
    %616 = vmatprep.subr.bf16.mxu0 0
    %617 = vmatpush1.bf16.msra.mxu0 0
    %618 = vmatprep.subr.bf16.mxu0 0
    %619 = vmatpush1.bf16.msra.mxu0 0
    %620 = vmatprep.subr.bf16.mxu0 0
    %621 = vmatpush1.bf16.msra.mxu0 0
    %622 = vmatprep.subr.bf16.mxu0 0
    %623 = vmatpush1.bf16.msra.mxu0 0
    %624 = vmatprep.subr.bf16.mxu0 0
    %625 = vmatpush1.bf16.msra.mxu0 0
    %626 = vmatprep.subr.bf16.mxu0 0
    %627 = vmatpush1.bf16.msra.mxu0 0
    %628 = vmatprep.mubr.bf16.mxu0 0
    %629 = vmatmul.mubr.bf16.gmra.mrb[0].mxu0 %v474
    %v630 = vpop.f32.mrb[0].mxu0
    %v631 = vadd.f32 %v591, %v630
    %v632 = vpop.f32.mrb[0].mxu0
    %v633 = vpop.f32.mrb[0].mxu0
    %v634 = vpop.f32.mrb[0].mxu0
    %635 = vdwg.mxu0
    %v636 = vmax.f32 %v631, 0.0
    %v637 = vpack.c.bf16 %v636, %v636
    %v638 = vld [vmem:[%s3] sm:$0xf]
    %v639 = vld [vmem:[%s3 + $0x4] sm:$0xf]
    %v640 = vld [vmem:[%s3 + $0x8] sm:$0xf]
    %v641 = vld [vmem:[%s3 + $0xc] sm:$0x3]
    %v642 = vld [vmem:[%s4] sm:$0x1]
    %v644 = vlaneseq
    %v645 = vshrl.u32 %v644, 7
    %v646 = vsub.s32 0, %v645
    %v647 = vrot.slane %v642, %v646
    %v653 = vunpack.c.l.b16 %v638
    %v654 = vunpack.c.l.b16 %v639
    %v655 = vunpack.c.l.b16 %v640
    %v656 = vunpack.c.l.b16 %v641
    %v657 = vpack.c.b16 %v654, %v653
    %v658 = vpack.c.b16 %v656, %v655
    %vm660 = vcmask 228352
    %v662 = vsel %vm660, %v637, 0
    %vm664 = vcmask 1045504
    %v666 = vsel %vm664, %v658, 0
    %668 = vmatprep.subr.bf16.mxu0 0
    %669 = vmatpush1.bf16.msra.mxu0 %v657
    %670 = vmatprep.subr.bf16.mxu0 0
    %671 = vmatpush1.bf16.msra.mxu0 %v666
    %672 = vmatprep.subr.bf16.mxu0 0
    %673 = vmatpush1.bf16.msra.mxu0 0
    %674 = vmatprep.subr.bf16.mxu0 0
    %675 = vmatpush1.bf16.msra.mxu0 0
    %676 = vmatprep.subr.bf16.mxu0 0
    %677 = vmatpush1.bf16.msra.mxu0 0
    %678 = vmatprep.subr.bf16.mxu0 0
    %679 = vmatpush1.bf16.msra.mxu0 0
    %680 = vmatprep.subr.bf16.mxu0 0
    %681 = vmatpush1.bf16.msra.mxu0 0
    %682 = vmatprep.subr.bf16.mxu0 0
    %683 = vmatpush1.bf16.msra.mxu0 0
    %684 = vmatprep.subr.bf16.mxu0 0
    %685 = vmatpush1.bf16.msra.mxu0 0
    %686 = vmatprep.subr.bf16.mxu0 0
    %687 = vmatpush1.bf16.msra.mxu0 0
    %688 = vmatprep.subr.bf16.mxu0 0
    %689 = vmatpush1.bf16.msra.mxu0 0
    %690 = vmatprep.subr.bf16.mxu0 0
    %691 = vmatpush1.bf16.msra.mxu0 0
    %692 = vmatprep.subr.bf16.mxu0 0
    %693 = vmatpush1.bf16.msra.mxu0 0
    %694 = vmatprep.subr.bf16.mxu0 0
    %695 = vmatpush1.bf16.msra.mxu0 0
    %696 = vmatprep.subr.bf16.mxu0 0
    %697 = vmatpush1.bf16.msra.mxu0 0
    %698 = vmatprep.subr.bf16.mxu0 0
    %699 = vmatpush1.bf16.msra.mxu0 0
    %700 = vmatprep.mubr.bf16.mxu0 0
    %701 = vmatmul.mubr.bf16.gmra.mrb[0].mxu0 %v662
    %v702 = vpop.f32.mrb[0].mxu0
    %v703 = vadd.f32 %v647, %v702
    %v704 = vpop.f32.mrb[0].mxu0
    %v705 = vpop.f32.mrb[0].mxu0
    %v706 = vpop.f32.mrb[0].mxu0
    %707 = vdwg.mxu0
    %vm708 = vcmask 74752
    %v709 = vsel %vm708, %v703, -inf
    %710 = vmax.xlane.f32.xlu0 %v709
    %v711 = vpop.xlane.xlu0 %710
    %v712 = vsub.f32 %v703, %v711
    %v713 = vmul.f32 %v712, 1.442695
    %v714 = vpow.pop %v713
    %v715 = vsel %vm708, %v714, 0.0
    %716 = vadd.xlane.f32.xlu0 %v715
    %v717 = vpop.xlane.xlu0 %716
    %v718 = vlog2.pop %v717
    %v719 = vmul.f32 %v718, 0.6931472
    %v720 = vsub.f32 %v712, %v719
    %721 = vst.msk [vmem:[#allocation2] sm:$0x3] %vm708, %v720
    // Predicated region
    $region22: #{tpu_custom_call.1} parent=1 // pred_check
      _
    $region23: #{tpu_custom_call.1} parent=1 // pred_check_branch
      %723 = sbr.rel (0) target = $region25
    $region24: #{tpu_custom_call.1} parent=1 // pred_region
      %s725 = ssub.s32 32, 32
      %726 = vsyncadd [#allocation3], %s725
      %s728 = sshll.u32 [#allocation2], 4
      %s729 = int_to_ptr.vmem [resolvable:$true] %s728
      %731 = dma.vmem_to_hbm [thread:$0]  %s729, 32, %s5, [#allocation3]
    $region25: #{tpu_custom_call.1} parent=1 // pred_fallthru
      _
    // Predicated region
    $region26: #{tpu_custom_call.1} parent=1 // pred_check
      _
    $region27: #{tpu_custom_call.1} parent=1 // pred_check_branch
      %733 = sbr.rel (0) target = $region29
    $region28: #{tpu_custom_call.1} parent=1 // pred_region
      %734 = dma.done [#allocation3], 32
    $region29: #{tpu_custom_call.1} parent=1 // pred_fallthru
      _
    %735 = vsyncpa [#allocation3], 1

</llo_original>
